<compile_context>
chip_gen: v5e
topology: v5e:2x2
jax: 0.10.0
libtpu: 0.0.40
codegen_flags: <defaults>
</compile_context>

<pallas_src>
import jax
import jax.numpy as jnp
from jax.experimental import pallas as pl
from jax.experimental.pallas import tpu as pltpu


def _round_up(n, m):
    return ((n + m - 1) // m) * m


def _pad2d(a, rows, cols):
    r, c = a.shape
    return jnp.pad(a, ((0, rows - r), (0, cols - c)))


def _mlp_kernel(x_ref, w1_ref, b1_ref, w2_ref, b2_ref, w3_ref, b3_ref, o_ref):
    # fc1 + relu  (bf16 MXU matmul, f32 accumulate, f32 bias + ReLU)
    h1 = jnp.dot(x_ref[...], w1_ref[...], preferred_element_type=jnp.float32)
    h1 = jnp.maximum(h1 + b1_ref[...], 0.0)
    # fc2 + relu
    h2 = jnp.dot(h1.astype(jnp.bfloat16), w2_ref[...],
                 preferred_element_type=jnp.float32)
    h2 = jnp.maximum(h2 + b2_ref[...], 0.0)
    # fc3 (no activation); output stored at true (unpadded) width in f32
    out = jnp.dot(h2.astype(jnp.bfloat16), w3_ref[...],
                  preferred_element_type=jnp.float32)
    o_ref[...] = out + b3_ref[...]


def prepare_params(params):
    """One-time parameter prep (hoisted out of the per-call path).

    Pads hidden dims to 128 lanes (exact: padded columns get zero weights and
    zero bias -> relu(0)=0; padded rows of w3 multiply zero activations) and
    casts MXU operands to bf16. Biases stay f32 for the VPU epilogue.
    Weights are stored (in_features, out_features): y = x @ W + b.
    """
    w1, b1, w2, b2, w3, b3 = (params["w1"], params["b1"], params["w2"],
                              params["b2"], params["w3"], params["b3"])
    num_sensors, h1 = w1.shape
    h2 = w2.shape[1]
    num_actions = w3.shape[1]
    H1 = _round_up(h1, 128)
    H2 = _round_up(h2, 128)
    return {
        "w1": _pad2d(w1, num_sensors, H1).astype(jnp.bfloat16),
        "b1": _pad2d(b1.reshape(1, -1), 1, H1).astype(jnp.float32),
        "w2": _pad2d(w2, H1, H2).astype(jnp.bfloat16),
        "b2": _pad2d(b2.reshape(1, -1), 1, H2).astype(jnp.float32),
        "w3": _pad2d(w3, H2, num_actions).astype(jnp.bfloat16),
        "b3": b3.reshape(1, -1).astype(jnp.float32),
    }


def neural_net_forward(x, prepped, *, tile_b=1024):
    """x: (B, num_sensors) float32; prepped: output of prepare_params()."""
    w1, b1, w2, b2, w3, b3 = (prepped["w1"], prepped["b1"], prepped["w2"],
                              prepped["b2"], prepped["w3"], prepped["b3"])
    B, num_sensors = x.shape
    assert w1.shape[0] == num_sensors
    H1 = w1.shape[1]
    H2 = w2.shape[1]
    num_actions = w3.shape[1]

    # Fat batch tiles: single step for B <= tile_b, >=2 steps otherwise
    # (dual-TC on v7x for large batches; per-step overhead amortized).
    if B > tile_b:
        TILE_B = tile_b
    else:
        TILE_B = max(8, _round_up(B, 8))
    grid = (pl.cdiv(B, TILE_B),)

    # Only per-call prep: tiny bf16 cast of x (no feature/batch padding).
    x_bf16 = x.astype(jnp.bfloat16)

    resident = lambda shape: pl.BlockSpec(shape, lambda i: (0, 0))

    out = pl.pallas_call(
        _mlp_kernel,
        out_shape=jax.ShapeDtypeStruct((B, num_actions), jnp.float32),
        grid=grid,
        in_specs=[
            # x tile streamed along batch; last dim = full num_sensors (legal).
            pl.BlockSpec((TILE_B, num_sensors), lambda i: (i, 0)),
            resident((num_sensors, H1)), resident((1, H1)),   # w1, b1
            resident((H1, H2)), resident((1, H2)),            # w2, b2
            resident((H2, num_actions)), resident((1, num_actions)),  # w3, b3
        ],
        out_specs=pl.BlockSpec((TILE_B, num_actions), lambda i: (i, 0)),
        compiler_params=pltpu.CompilerParams(
            dimension_semantics=("parallel",)),
    )(x_bf16, w1, b1, w2, b2, w3, b3)
    return out


def init_params(key, num_sensors, hidden, num_actions):
    """Deterministic init mimicking PyTorch nn.Linear (uniform +-1/sqrt(fan_in)).
    Weights stored (in_features, out_features)."""
    h1, h2 = hidden
    dims = [(num_sensors, h1), (h1, h2), (h2, num_actions)]
    params = {}
    for idx, (fan_in, fan_out) in enumerate(dims, start=1):
        key, kw, kb = jax.random.split(key, 3)
        bound = 1.0 / jnp.sqrt(float(fan_in))
        params[f"w{idx}"] = jax.random.uniform(
            kw, (fan_in, fan_out), jnp.float32, -bound, bound)
        params[f"b{idx}"] = jax.random.uniform(
            kb, (1, fan_out), jnp.float32, -bound, bound)
    return params


def _reference(x, params):
    # Plain-JAX f32 reference (bf16 quantization of the kernel's MXU inputs
    # introduces ~1e-3 relative error; tolerances below account for that).
    ref = jnp.maximum(x @ params["w1"] + params["b1"], 0.0)
    ref = jnp.maximum(ref @ params["w2"] + params["b2"], 0.0)
    return ref @ params["w3"] + params["b3"]


if __name__ == "__main__":
    # Small shapes consistent with Neural_net(num_sensors, params, num_actions)
    num_sensors = 32
    hidden = (64, 64)       # params[0], params[1]
    num_actions = 8

    key = jax.random.PRNGKey(0)
    key, kx = jax.random.split(key)
    params = init_params(key, num_sensors, hidden, num_actions)
    prepped = prepare_params(params)   # one-time weight prep (hoisted)

    # --- small batch (single grid step, partial-free) -------------------------
    B = 8
    x = jax.random.normal(kx, (B, num_sensors), jnp.float32)
    out = neural_net_forward(x, prepped)
    jax.block_until_ready(out)
    ref = _reference(x, params)
    assert out.shape == (B, num_actions)
    assert jnp.allclose(out, ref, atol=5e-2, rtol=5e-2)

    # --- batch exercising the ragged-tail (masked writeback) path -------------
    key, kx2 = jax.random.split(key)
    B2 = 300
    x2 = jax.random.normal(kx2, (B2, num_sensors), jnp.float32)
    out2 = neural_net_forward(x2, prepped)
    jax.block_until_ready(out2)
    ref2 = _reference(x2, params)
    assert out2.shape == (B2, num_actions)
    assert jnp.allclose(out2, ref2, atol=5e-2, rtol=5e-2)

    # --- batch exercising multiple grid steps (dual-TC path on v7x) -----------
    key, kx3 = jax.random.split(key)
    B3 = 2048 + 40
    x3 = jax.random.normal(kx3, (B3, num_sensors), jnp.float32)
    out3 = neural_net_forward(x3, prepped)
    jax.block_until_ready(out3)
    ref3 = _reference(x3, params)
    assert out3.shape == (B3, num_actions)
    assert jnp.allclose(out3, ref3, atol=5e-2, rtol=5e-2)

    print("KERNEL_OK")
</pallas_src>

<mosaic_0001>
module attributes {stable_mosaic.version = 11 : i64} {
  func.func @_mlp_kernel(%arg0: i32, %arg1: memref<8x32xbf16, #tpu.memory_space<vmem>>, %arg2: memref<32x128xbf16, #tpu.memory_space<vmem>>, %arg3: memref<1x128xf32, #tpu.memory_space<vmem>>, %arg4: memref<128x128xbf16, #tpu.memory_space<vmem>>, %arg5: memref<1x128xf32, #tpu.memory_space<vmem>>, %arg6: memref<128x8xbf16, #tpu.memory_space<vmem>>, %arg7: memref<1x8xf32, #tpu.memory_space<vmem>>, %arg8: memref<8x8xf32, #tpu.memory_space<vmem>>) attributes {dimension_semantics = [#tpu.dimension_semantics<parallel>], iteration_bounds = array<i64: 1>, scalar_prefetch = 0 : i64, scratch_operands = 0 : i64, tpu.core_type = #tpu.core_type<tc>, window_params = [{transform_indices = @transform_0, window_bounds = array<i64: 8, 32>}, {pipeline_mode = #tpu.pipeline_mode<synchronous>, transform_indices = @transform_1, window_bounds = array<i64: 32, 128>}, {pipeline_mode = #tpu.pipeline_mode<synchronous>, transform_indices = @transform_2, window_bounds = array<i64: 1, 128>}, {pipeline_mode = #tpu.pipeline_mode<synchronous>, transform_indices = @transform_3, window_bounds = array<i64: 128, 128>}, {pipeline_mode = #tpu.pipeline_mode<synchronous>, transform_indices = @transform_4, window_bounds = array<i64: 1, 128>}, {pipeline_mode = #tpu.pipeline_mode<synchronous>, transform_indices = @transform_5, window_bounds = array<i64: 128, 8>}, {pipeline_mode = #tpu.pipeline_mode<synchronous>, transform_indices = @transform_6, window_bounds = array<i64: 1, 8>}, {transform_indices = @transform_7, window_bounds = array<i64: 8, 8>}]} {
    %c0 = arith.constant 0 : index
    %c0_0 = arith.constant 0 : index
    %0 = vector.load %arg1[%c0, %c0_0] : memref<8x32xbf16, #tpu.memory_space<vmem>>, vector<8x32xbf16>
    %c0_1 = arith.constant 0 : index
    %c0_2 = arith.constant 0 : index
    %1 = vector.load %arg2[%c0_1, %c0_2] : memref<32x128xbf16, #tpu.memory_space<vmem>>, vector<32x128xbf16>
    %cst = arith.constant dense<0.000000e+00> : vector<8x128xf32>
    %2 = tpu.matmul %0, %1, %cst {dimension_numbers = #tpu.dot_dimension_numbers<[1], [0], [0], [1], [0, 0, 1, 1], [], []>} : vector<8x32xbf16>, vector<32x128xbf16>, vector<8x128xf32> -> vector<8x128xf32>
    %c0_3 = arith.constant 0 : index
    %c0_4 = arith.constant 0 : index
    %3 = vector.load %arg3[%c0_3, %c0_4] : memref<1x128xf32, #tpu.memory_space<vmem>>, vector<1x128xf32>
    %4 = vector.broadcast %3 : vector<1x128xf32> to vector<8x128xf32>
    %5 = arith.addf %2, %4 : vector<8x128xf32>
    %cst_5 = arith.constant 0.000000e+00 : f32
    %6 = vector.broadcast %cst_5 : f32 to vector<8x128xf32>
    %7 = arith.maximumf %5, %6 : vector<8x128xf32>
    %8 = arith.truncf %7 : vector<8x128xf32> to vector<8x128xbf16>
    %c0_6 = arith.constant 0 : index
    %c0_7 = arith.constant 0 : index
    %9 = vector.load %arg4[%c0_6, %c0_7] : memref<128x128xbf16, #tpu.memory_space<vmem>>, vector<128x128xbf16>
    %cst_8 = arith.constant dense<0.000000e+00> : vector<8x128xf32>
    %10 = tpu.matmul %8, %9, %cst_8 {dimension_numbers = #tpu.dot_dimension_numbers<[1], [0], [0], [1], [0, 0, 1, 1], [], []>} : vector<8x128xbf16>, vector<128x128xbf16>, vector<8x128xf32> -> vector<8x128xf32>
    %c0_9 = arith.constant 0 : index
    %c0_10 = arith.constant 0 : index
    %11 = vector.load %arg5[%c0_9, %c0_10] : memref<1x128xf32, #tpu.memory_space<vmem>>, vector<1x128xf32>
    %12 = vector.broadcast %11 : vector<1x128xf32> to vector<8x128xf32>
    %13 = arith.addf %10, %12 : vector<8x128xf32>
    %cst_11 = arith.constant 0.000000e+00 : f32
    %14 = vector.broadcast %cst_11 : f32 to vector<8x128xf32>
    %15 = arith.maximumf %13, %14 : vector<8x128xf32>
    %16 = arith.truncf %15 : vector<8x128xf32> to vector<8x128xbf16>
    %c0_12 = arith.constant 0 : index
    %c0_13 = arith.constant 0 : index
    %17 = vector.load %arg6[%c0_12, %c0_13] : memref<128x8xbf16, #tpu.memory_space<vmem>>, vector<128x8xbf16>
    %cst_14 = arith.constant dense<0.000000e+00> : vector<8x8xf32>
    %18 = tpu.matmul %16, %17, %cst_14 {dimension_numbers = #tpu.dot_dimension_numbers<[1], [0], [0], [1], [0, 0, 1, 1], [], []>} : vector<8x128xbf16>, vector<128x8xbf16>, vector<8x8xf32> -> vector<8x8xf32>
    %c0_15 = arith.constant 0 : index
    %c0_16 = arith.constant 0 : index
    %19 = vector.load %arg7[%c0_15, %c0_16] : memref<1x8xf32, #tpu.memory_space<vmem>>, vector<1x8xf32>
    %20 = vector.broadcast %19 : vector<1x8xf32> to vector<8x8xf32>
    %21 = arith.addf %18, %20 : vector<8x8xf32>
    %c0_17 = arith.constant 0 : index
    %c0_18 = arith.constant 0 : index
    %22 = vector.load %arg8[%c0_17, %c0_18] : memref<8x8xf32, #tpu.memory_space<vmem>>, vector<8x8xf32>
    tpu.vector_store %arg8[%c0_17, %c0_18], %21 {strides = array<i32>} : memref<8x8xf32, #tpu.memory_space<vmem>>, vector<8x8xf32>,
    return
  }
  func.func @transform_0(%arg0: i32) -> (i32, i32) {
    %c0_i32 = arith.constant 0 : i32
    %c0_i32_0 = arith.constant 0 : i32
    return %arg0, %c0_i32 : i32, i32
  }
  func.func @transform_1(%arg0: i32) -> (i32, i32) {
    %c0_i32 = arith.constant 0 : i32
    %c0_i32_0 = arith.constant 0 : i32
    %c0_i32_1 = arith.constant 0 : i32
    return %c0_i32, %c0_i32_0 : i32, i32
  }
  func.func @transform_2(%arg0: i32) -> (i32, i32) {
    %c0_i32 = arith.constant 0 : i32
    %c0_i32_0 = arith.constant 0 : i32
    %c0_i32_1 = arith.constant 0 : i32
    return %c0_i32, %c0_i32_0 : i32, i32
  }
  func.func @transform_3(%arg0: i32) -> (i32, i32) {
    %c0_i32 = arith.constant 0 : i32
    %c0_i32_0 = arith.constant 0 : i32
    %c0_i32_1 = arith.constant 0 : i32
    return %c0_i32, %c0_i32_0 : i32, i32
  }
  func.func @transform_4(%arg0: i32) -> (i32, i32) {
    %c0_i32 = arith.constant 0 : i32
    %c0_i32_0 = arith.constant 0 : i32
    %c0_i32_1 = arith.constant 0 : i32
    return %c0_i32, %c0_i32_0 : i32, i32
  }
  func.func @transform_5(%arg0: i32) -> (i32, i32) {
    %c0_i32 = arith.constant 0 : i32
    %c0_i32_0 = arith.constant 0 : i32
    %c0_i32_1 = arith.constant 0 : i32
    return %c0_i32, %c0_i32_0 : i32, i32
  }
  func.func @transform_6(%arg0: i32) -> (i32, i32) {
    %c0_i32 = arith.constant 0 : i32
    %c0_i32_0 = arith.constant 0 : i32
    %c0_i32_1 = arith.constant 0 : i32
    return %c0_i32, %c0_i32_0 : i32, i32
  }
  func.func @transform_7(%arg0: i32) -> (i32, i32) {
    %c0_i32 = arith.constant 0 : i32
    %c0_i32_0 = arith.constant 0 : i32
    return %arg0, %c0_i32 : i32, i32
  }
}

</mosaic_0001>

<llo_original>
// kernel: tpu_custom_call.1
$region0: #{tpu_custom_call.1}
  #allocation0 [shape = 'u32[]', space=smem, size = 0x4, offset = 0x4, fixed_abs, tag = 'smem constant byte address 0x4 - core index']
  #allocation1 [shape = 'u32[72,128]{1,0:T(1,128)}', space=vmem, size = 0x9000, scoped, tag = 'internal scratch']
  %s0 = inlined_call_operand.vmem [shape: bf16[8,32], index: 0, kind: input, shape index: {}]
  %s1 = inlined_call_operand.hbm [shape: bf16[32,128], index: 1, kind: input, shape index: {}]
  %s2 = inlined_call_operand.hbm [shape: f32[1,128], index: 2, kind: input, shape index: {}]
  %s3 = inlined_call_operand.vmem [shape: bf16[128,128], index: 3, kind: input, shape index: {}]
  %s4 = inlined_call_operand.hbm [shape: f32[1,128], index: 4, kind: input, shape index: {}]
  %s5 = inlined_call_operand.vmem [shape: bf16[128,8], index: 5, kind: input, shape index: {}]
  %s6 = inlined_call_operand.vmem [shape: f32[1,8], index: 6, kind: input, shape index: {}]
  %s7 = inlined_call_operand.hbm [shape: f32[8,8], index: 7, kind: output, shape index: {}]
  %s8 = sld [smem:[#allocation0]]
  $region50: #{tpu_custom_call.1} parent=0
    _
  %s10 = ssub.s32 1, %s8
  %s11 = scalar_select 0, %s10, %s8
  $region1: #{tpu_custom_call.1} parent=0
    #allocation2 [shape = 'u8[8192]{0}', space=vmem, size = 0x2000, scoped, tag = 'input window, operand 1, single buffered']
    #allocation3 [shape = 's32[1]{0}', space=sflag, size = 0x4, scoped, tag = 'scoped memory for tpu_custom_call.1']
    #allocation4 [shape = 's32[1]{0}', space=sflag, size = 0x4, scoped, tag = 'scoped memory for tpu_custom_call.1']
    #allocation5 [shape = 'u8[512]{0}', space=vmem, size = 0x400, scoped, tag = 'input window, operand 2, single buffered']
    #allocation6 [shape = 's32[1]{0}', space=sflag, size = 0x4, scoped, tag = 'scoped memory for tpu_custom_call.1']
    #allocation7 [shape = 'u8[512]{0}', space=vmem, size = 0x400, scoped, tag = 'input window, operand 4, single buffered']
    #allocation8 [shape = 'u8[4096]{0}', space=vmem, size = 0x1000, scoped, tag = 'output window, operand 0, single buffered']
    %12 = vsyncpa [#allocation3], 0
    %13 = vsyncpa [#allocation6], 0
    %14 = vsyncpa [#allocation4], 0
    // Predicated region
    $region2: #{tpu_custom_call.1} parent=1 // pred_check
      _
    $region3: #{tpu_custom_call.1} parent=1 // pred_check_branch
      %16 = sbr.rel (0) target = $region5
    $region4: #{tpu_custom_call.1} parent=1 // pred_region
      _
    $region5: #{tpu_custom_call.1} parent=1 // pred_fallthru
      _
    // Predicated region
    $region6: #{tpu_custom_call.1} parent=1 // pred_check
      _
    $region7: #{tpu_custom_call.1} parent=1 // pred_check_branch
      %18 = sbr.rel (0) target = $region9
    $region8: #{tpu_custom_call.1} parent=1 // pred_region
      %20 = vsyncadd [#allocation3], 0
      %s21 = sshll.u32 %s1, 4
      %s22 = int_to_ptr.hbm [resolvable:$true] %s21
      %s23 = sshll.u32 [#allocation2], 4
      %s24 = int_to_ptr.vmem [resolvable:$true] %s23
      %29 = dma.hbm_to_vmem [thread:$0]  %s22, 256, %s24, [#allocation3], 64, 64, 4
    $region9: #{tpu_custom_call.1} parent=1 // pred_fallthru
      _
    // Predicated region
    $region10: #{tpu_custom_call.1} parent=1 // pred_check
      _
    $region11: #{tpu_custom_call.1} parent=1 // pred_check_branch
      %31 = sbr.rel (0) target = $region13
    $region12: #{tpu_custom_call.1} parent=1 // pred_region
      %33 = vsyncadd [#allocation6], 0
      %s35 = sshll.u32 %s2, 4
      %s36 = int_to_ptr.hbm [resolvable:$true] %s35
      %s37 = sshll.u32 [#allocation5], 4
      %s38 = int_to_ptr.vmem [resolvable:$true] %s37
      %40 = dma.hbm_to_vmem [thread:$0]  %s36, 16, %s38, [#allocation6]
    $region13: #{tpu_custom_call.1} parent=1 // pred_fallthru
      _
    // Predicated region
    $region14: #{tpu_custom_call.1} parent=1 // pred_check
      _
    $region15: #{tpu_custom_call.1} parent=1 // pred_check_branch
      %42 = sbr.rel (0) target = $region17
    $region16: #{tpu_custom_call.1} parent=1 // pred_region
      _
    $region17: #{tpu_custom_call.1} parent=1 // pred_fallthru
      _
    // Predicated region
    $region18: #{tpu_custom_call.1} parent=1 // pred_check
      _
    $region19: #{tpu_custom_call.1} parent=1 // pred_check_branch
      %44 = sbr.rel (0) target = $region21
    $region20: #{tpu_custom_call.1} parent=1 // pred_region
      %46 = vsyncadd [#allocation6], 0
      %s48 = sshll.u32 %s4, 4
      %s49 = int_to_ptr.hbm [resolvable:$true] %s48
      %s50 = sshll.u32 [#allocation7], 4
      %s51 = int_to_ptr.vmem [resolvable:$true] %s50
      %53 = dma.hbm_to_vmem [thread:$0]  %s49, 16, %s51, [#allocation6]
    $region21: #{tpu_custom_call.1} parent=1 // pred_fallthru
      _
    // Predicated region
    $region22: #{tpu_custom_call.1} parent=1 // pred_check
      _
    $region23: #{tpu_custom_call.1} parent=1 // pred_check_branch
      %55 = sbr.rel (0) target = $region25
    $region24: #{tpu_custom_call.1} parent=1 // pred_region
      _
    $region25: #{tpu_custom_call.1} parent=1 // pred_fallthru
      _
    // Predicated region
    $region26: #{tpu_custom_call.1} parent=1 // pred_check
      _
    $region27: #{tpu_custom_call.1} parent=1 // pred_check_branch
      %57 = sbr.rel (0) target = $region29
    $region28: #{tpu_custom_call.1} parent=1 // pred_region
      _
    $region29: #{tpu_custom_call.1} parent=1 // pred_fallthru
      _
    // Predicated region
    $region30: #{tpu_custom_call.1} parent=1 // pred_check
      _
    $region31: #{tpu_custom_call.1} parent=1 // pred_check_branch
      %59 = sbr.rel (0) target = $region33
    $region32: #{tpu_custom_call.1} parent=1 // pred_region
      %61 = dma.done [#allocation3], 256
    $region33: #{tpu_custom_call.1} parent=1 // pred_fallthru
      _
    // Predicated region
    $region34: #{tpu_custom_call.1} parent=1 // pred_check
      _
    $region35: #{tpu_custom_call.1} parent=1 // pred_check_branch
      %63 = sbr.rel (0) target = $region37
    $region36: #{tpu_custom_call.1} parent=1 // pred_region
      %65 = dma.done [#allocation6], 16
    $region37: #{tpu_custom_call.1} parent=1 // pred_fallthru
      _
    // Predicated region
    $region38: #{tpu_custom_call.1} parent=1 // pred_check
      _
    $region39: #{tpu_custom_call.1} parent=1 // pred_check_branch
      %67 = sbr.rel (0) target = $region41
    $region40: #{tpu_custom_call.1} parent=1 // pred_region
      %69 = dma.done [#allocation6], 16
    $region41: #{tpu_custom_call.1} parent=1 // pred_fallthru
      _
    %v71 = vld [vmem:[%s0] sm:$0xf]
    %v72 = vld [vmem:[#allocation2] sm:$0xf]
    %v73 = vld [vmem:[#allocation2 + $0x4] sm:$0xf]
    %v74 = vld [vmem:[#allocation2 + $0x8] sm:$0xf]
    %v75 = vld [vmem:[#allocation2 + $0xc] sm:$0xf]
    %v76 = vld [vmem:[#allocation5] sm:$0x1]
    %v78 = vperm.slane %v76, 0
    %v84 = vunpack.c.l.b16 %v72
    %v85 = vunpack.c.l.b16 %v73
    %v86 = vunpack.c.l.b16 %v74
    %v87 = vunpack.c.l.b16 %v75
    %v88 = vpack.c.b16 %v85, %v84
    %v89 = vpack.c.b16 %v87, %v86
    %vm92 = vcmask 261120
    %v94 = vsel %vm92, %v71, 0
    %96 = vmatpush.bf16.msra.mxu0 0
    %97 = vmatpush.bf16.msra.mxu0 0
    %98 = vmatpush.bf16.msra.mxu0 0
    %99 = vmatpush.bf16.msra.mxu0 0
    %100 = vmatpush.bf16.msra.mxu0 0
    %101 = vmatpush.bf16.msra.mxu0 0
    %102 = vmatpush.bf16.msra.mxu0 %v89
    %103 = vmatpush.bf16.msra.mxu0 %v88
    %104 = vmatmul.bf16.gmra.mxu0 %v94
    %v105 = vpop.f32.mrf.mxu0
    %v106 = vadd.f32 %v78, %v105
    %v107 = vpop.f32.mrf.mxu0
    %108 = vdwg.mxu0
    %v109 = vmax.f32 %v106, 0.0
    %v110 = vpack.c.bf16 %v109, %v109
    %v111 = vld [vmem:[%s3] sm:$0xf]
    %v112 = vld [vmem:[%s3 + $0x4] sm:$0xf]
    %v113 = vld [vmem:[%s3 + $0x8] sm:$0xf]
    %v114 = vld [vmem:[%s3 + $0xc] sm:$0xf]
    %v115 = vld [vmem:[%s3 + $0x10] sm:$0xf]
    %v116 = vld [vmem:[%s3 + $0x14] sm:$0xf]
    %v117 = vld [vmem:[%s3 + $0x18] sm:$0xf]
    %v118 = vld [vmem:[%s3 + $0x1c] sm:$0xf]
    %v119 = vld [vmem:[%s3 + $0x20] sm:$0xf]
    %v120 = vld [vmem:[%s3 + $0x24] sm:$0xf]
    %v121 = vld [vmem:[%s3 + $0x28] sm:$0xf]
    %v122 = vld [vmem:[%s3 + $0x2c] sm:$0xf]
    %v123 = vld [vmem:[%s3 + $0x30] sm:$0xf]
    %v124 = vld [vmem:[%s3 + $0x34] sm:$0xf]
    %v125 = vld [vmem:[%s3 + $0x38] sm:$0xf]
    %v126 = vld [vmem:[%s3 + $0x3c] sm:$0xf]
    %v127 = vld [vmem:[#allocation7] sm:$0x1]
    %v129 = vperm.slane %v127, 0
    %v147 = vunpack.c.l.b16 %v111
    %v148 = vunpack.c.l.b16 %v112
    %v149 = vunpack.c.l.b16 %v113
    %v150 = vunpack.c.l.b16 %v114
    %v151 = vunpack.c.l.b16 %v115
    %v152 = vunpack.c.l.b16 %v116
    %v153 = vunpack.c.l.b16 %v117
    %v154 = vunpack.c.l.b16 %v118
    %v155 = vunpack.c.l.b16 %v119
    %v156 = vunpack.c.l.b16 %v120
    %v157 = vunpack.c.l.b16 %v121
    %v158 = vunpack.c.l.b16 %v122
    %v159 = vunpack.c.l.b16 %v123
    %v160 = vunpack.c.l.b16 %v124
    %v161 = vunpack.c.l.b16 %v125
    %v162 = vunpack.c.l.b16 %v126
    %v163 = vpack.c.b16 %v148, %v147
    %v164 = vpack.c.b16 %v150, %v149
    %v165 = vpack.c.b16 %v152, %v151
    %v166 = vpack.c.b16 %v154, %v153
    %v167 = vpack.c.b16 %v156, %v155
    %v168 = vpack.c.b16 %v158, %v157
    %v169 = vpack.c.b16 %v160, %v159
    %v170 = vpack.c.b16 %v162, %v161
    %179 = vmatpush.bf16.msra.mxu0 %v170
    %180 = vmatpush.bf16.msra.mxu0 %v169
    %181 = vmatpush.bf16.msra.mxu0 %v168
    %182 = vmatpush.bf16.msra.mxu0 %v167
    %183 = vmatpush.bf16.msra.mxu0 %v166
    %184 = vmatpush.bf16.msra.mxu0 %v165
    %185 = vmatpush.bf16.msra.mxu0 %v164
    %186 = vmatpush.bf16.msra.mxu0 %v163
    %187 = vmatmul.bf16.gmra.mxu0 %v110
    %v188 = vpop.f32.mrf.mxu0
    %v189 = vadd.f32 %v129, %v188
    %v190 = vpop.f32.mrf.mxu0
    %191 = vdwg.mxu0
    %v192 = vmax.f32 %v189, 0.0
    %v193 = vpack.c.bf16 %v192, %v192
    %v194 = vld [vmem:[%s5] sm:$0xf]
    %v195 = vld [vmem:[%s5 + $0x4] sm:$0xf]
    %v196 = vld [vmem:[%s5 + $0x8] sm:$0xf]
    %v197 = vld [vmem:[%s5 + $0xc] sm:$0xf]
    %v198 = vld [vmem:[%s5 + $0x10] sm:$0xf]
    %v199 = vld [vmem:[%s5 + $0x14] sm:$0xf]
    %v200 = vld [vmem:[%s5 + $0x18] sm:$0xf]
    %v201 = vld [vmem:[%s5 + $0x1c] sm:$0xf]
    %v202 = vld [vmem:[%s5 + $0x20] sm:$0xf]
    %v203 = vld [vmem:[%s5 + $0x24] sm:$0xf]
    %v204 = vld [vmem:[%s5 + $0x28] sm:$0xf]
    %v205 = vld [vmem:[%s5 + $0x2c] sm:$0xf]
    %v206 = vld [vmem:[%s5 + $0x30] sm:$0xf]
    %v207 = vld [vmem:[%s5 + $0x34] sm:$0xf]
    %v208 = vld [vmem:[%s5 + $0x38] sm:$0xf]
    %v209 = vld [vmem:[%s5 + $0x3c] sm:$0xf]
    %v210 = vld [vmem:[%s6] sm:$0x1]
    %v212 = vperm.slane %v210, 0
    %v230 = vunpack.c.l.b16 %v194
    %v231 = vunpack.c.l.b16 %v195
    %v232 = vunpack.c.l.b16 %v196
    %v233 = vunpack.c.l.b16 %v197
    %v234 = vunpack.c.l.b16 %v198
    %v235 = vunpack.c.l.b16 %v199
    %v236 = vunpack.c.l.b16 %v200
    %v237 = vunpack.c.l.b16 %v201
    %v238 = vunpack.c.l.b16 %v202
    %v239 = vunpack.c.l.b16 %v203
    %v240 = vunpack.c.l.b16 %v204
    %v241 = vunpack.c.l.b16 %v205
    %v242 = vunpack.c.l.b16 %v206
    %v243 = vunpack.c.l.b16 %v207
    %v244 = vunpack.c.l.b16 %v208
    %v245 = vunpack.c.l.b16 %v209
    %v246 = vpack.c.b16 %v231, %v230
    %v247 = vpack.c.b16 %v233, %v232
    %v248 = vpack.c.b16 %v235, %v234
    %v249 = vpack.c.b16 %v237, %v236
    %v250 = vpack.c.b16 %v239, %v238
    %v251 = vpack.c.b16 %v241, %v240
    %v252 = vpack.c.b16 %v243, %v242
    %v253 = vpack.c.b16 %v245, %v244
    %262 = vmatpush.bf16.msra.mxu0 %v253
    %263 = vmatpush.bf16.msra.mxu0 %v252
    %264 = vmatpush.bf16.msra.mxu0 %v251
    %265 = vmatpush.bf16.msra.mxu0 %v250
    %266 = vmatpush.bf16.msra.mxu0 %v249
    %267 = vmatpush.bf16.msra.mxu0 %v248
    %268 = vmatpush.bf16.msra.mxu0 %v247
    %269 = vmatpush.bf16.msra.mxu0 %v246
    %270 = vmatmul.bf16.gmra.mxu0 %v193
    %v271 = vpop.f32.mrf.mxu0
    %v272 = vadd.f32 %v212, %v271
    %v273 = vpop.f32.mrf.mxu0
    %274 = vdwg.mxu0
    %vm275 = vcmask 64512
    %276 = vst.msk [vmem:[#allocation8] sm:$0xff] %vm275, %v272
    // Predicated region
    $region42: #{tpu_custom_call.1} parent=1 // pred_check
      _
    $region43: #{tpu_custom_call.1} parent=1 // pred_check_branch
      %278 = sbr.rel (0) target = $region45
    $region44: #{tpu_custom_call.1} parent=1 // pred_region
      %280 = vsyncadd [#allocation4], 0
      %s282 = sshll.u32 [#allocation8], 4
      %s283 = int_to_ptr.vmem [resolvable:$true] %s282
      %s284 = sshll.u32 %s7, 4
      %s285 = int_to_ptr.hbm [resolvable:$true] %s284
      %287 = dma.vmem_to_hbm [thread:$0]  %s283, 128, %s285, [#allocation4]
    $region45: #{tpu_custom_call.1} parent=1 // pred_fallthru
      _
    // Predicated region
    $region46: #{tpu_custom_call.1} parent=1 // pred_check
      _
    $region47: #{tpu_custom_call.1} parent=1 // pred_check_branch
      %289 = sbr.rel (0) target = $region49
    $region48: #{tpu_custom_call.1} parent=1 // pred_region
      %291 = dma.done [#allocation4], 128
    $region49: #{tpu_custom_call.1} parent=1 // pred_fallthru
      _
    %292 = vsyncpa [#allocation3], 1
    %293 = vsyncpa [#allocation6], 1
    %294 = vsyncpa [#allocation4], 1

</llo_original>
